<compile_context>
chip_gen: v6e
topology: v6e:2x2x1
jax: 0.10.0
libtpu: 0.0.40
codegen_flags: <defaults>
</compile_context>

<pallas_src>
import functools

import jax
import jax.numpy as jnp
from jax.experimental import pallas as pl
from jax.experimental.pallas import tpu as pltpu

LANES = 128
NEG_INF = -1e9
VMEM_LIMIT = 32 * 1024 * 1024  # explicit; safe on v5e/v6e/v7x


def _round_up(v, m):
    return (v + m - 1) // m * m


def _pick_row_tile(n_pad):
    for t in (512, 256, 128):
        if n_pad % t == 0:
            return t
    return n_pad


def _build_score_proj(a_src, a_dst, heads, head_dim):
    """Block-diagonal [H*D, 128] matrix: col h -> a_dst[h], col H+h -> a_src[h]."""
    assert 2 * heads <= LANES
    hd = heads * head_dim
    proj = jnp.zeros((hd, LANES), jnp.float32)
    for h in range(heads):
        proj = proj.at[h * head_dim:(h + 1) * head_dim, h].set(a_dst[h])
        proj = proj.at[h * head_dim:(h + 1) * head_dim, heads + h].set(a_src[h])
    return proj


# ---------------------------------------------------------------------------
# Kernel 1: per-layer feature transform + fused attention-score projection.
# ---------------------------------------------------------------------------
def _transform_kernel(x_ref, w_ref, aproj_ref, xw_ref, sc_ref):
    xw = jnp.dot(x_ref[...], w_ref[...],
                 preferred_element_type=jnp.float32)            # [TR, H*D] f32
    xw_ref[...] = xw.astype(xw_ref.dtype)                       # bf16 for layer-B MXU
    sc_ref[...] = jnp.dot(xw, aproj_ref[...],
                          preferred_element_type=jnp.float32)   # [TR, 128] f32


def gat_transform(x_bf16, w_bf16, a_proj, *, row_tile):
    n_pad, fin = x_bf16.shape
    hd = w_bf16.shape[1]
    grid = (n_pad // row_tile,)
    return pl.pallas_call(
        _transform_kernel,
        grid=grid,
        in_specs=[
            pl.BlockSpec((row_tile, fin), lambda i: (i, 0)),
            pl.BlockSpec((fin, hd), lambda i: (0, 0)),
            pl.BlockSpec((hd, LANES), lambda i: (0, 0)),
        ],
        out_specs=[
            pl.BlockSpec((row_tile, hd), lambda i: (i, 0)),
            pl.BlockSpec((row_tile, LANES), lambda i: (i, 0)),
        ],
        out_shape=[
            jax.ShapeDtypeStruct((n_pad, hd), jnp.bfloat16),
            jax.ShapeDtypeStruct((n_pad, LANES), jnp.float32),
        ],
        compiler_params=pltpu.CompilerParams(
            dimension_semantics=("parallel",),
            vmem_limit_bytes=VMEM_LIMIT),
    )(x_bf16, w_bf16, a_proj)


# ---------------------------------------------------------------------------
# Kernel 2: masked attention softmax + aggregation (+ fused ELU [+ Linear]).
# ---------------------------------------------------------------------------
def _attention_kernel(adj_ref, sdst_ref, ssrc_ref, xw_ref, bias_ref, *rest,
                      heads, head_dim, fuse_fc):
    if fuse_fc:
        wfc_ref, bfc_ref, out_ref = rest
    else:
        (out_ref,) = rest

    mask = adj_ref[...] > 0                                   # [TR, Np] bool (int8 in)
    xw = xw_ref[...]                                          # [Np, H*D] bf16
    sdst = sdst_ref[...]                                      # [TR, 128] f32 (cols 0..H-1)
    ssrc = ssrc_ref[...]                                      # [H, Np]   f32
    bias = bias_ref[...]                                      # [1, H*D]  f32

    outs = []
    for h in range(heads):
        e = sdst[:, h:h + 1] + ssrc[h:h + 1, :]               # [TR, Np] f32
        e = jnp.where(mask, jnp.where(e > 0, e, 0.2 * e), NEG_INF)  # LeakyReLU + mask
        e = e - jnp.max(e, axis=1, keepdims=True)
        p = jnp.exp(e)
        inv = pl.reciprocal(jnp.sum(p, axis=1, keepdims=True), approx=True)
        attn = (p * inv).astype(xw.dtype)                     # bf16 for MXU
        outs.append(jnp.dot(attn, xw[:, h * head_dim:(h + 1) * head_dim],
                            preferred_element_type=jnp.float32))   # [TR, D] f32

    res = jnp.concatenate(outs, axis=1) + bias                # [TR, H*D] f32
    res = jnp.where(res > 0, res, jnp.exp(jnp.minimum(res, 0.0)) - 1.0)  # ELU
    if fuse_fc:
        res = jnp.dot(res.astype(wfc_ref.dtype), wfc_ref[...],
                      preferred_element_type=jnp.float32) + bfc_ref[...]
    out_ref[...] = res.astype(out_ref.dtype)                  # one lane-dense store


def gat_attention(adj, scores, xw_bf16, bias, *, heads, head_dim, row_tile,
                  fc_w=None, fc_b=None):
    n_pad = adj.shape[0]
    hd = heads * head_dim
    fuse_fc = fc_w is not None
    out_dim = fc_w.shape[1] if fuse_fc else hd

    # glue: tiny transpose so per-head source scores are a lane-dense row
    s_src_t = jnp.transpose(scores[:, heads:2 * heads])       # [H, Np]

    in_specs = [
        pl.BlockSpec((row_tile, n_pad), lambda i: (i, 0)),    # adj tile (int8)
        pl.BlockSpec((row_tile, LANES), lambda i: (i, 0)),    # dest scores tile
        pl.BlockSpec((heads, n_pad), lambda i: (0, 0)),       # src scores^T (resident)
        pl.BlockSpec((n_pad, hd), lambda i: (0, 0)),          # xw (resident, bf16)
        pl.BlockSpec((1, hd), lambda i: (0, 0)),              # bias
    ]
    args = [adj, scores, s_src_t, xw_bf16, bias]
    if fuse_fc:
        in_specs += [pl.BlockSpec((hd, out_dim), lambda i: (0, 0)),
                     pl.BlockSpec((1, out_dim), lambda i: (0, 0))]
        args += [fc_w, fc_b]

    kernel = functools.partial(_attention_kernel, heads=heads,
                               head_dim=head_dim, fuse_fc=fuse_fc)
    return pl.pallas_call(
        kernel,
        grid=(n_pad // row_tile,),
        in_specs=in_specs,
        out_specs=pl.BlockSpec((row_tile, out_dim), lambda i: (i, 0)),
        out_shape=jax.ShapeDtypeStruct((n_pad, out_dim), jnp.float32),
        compiler_params=pltpu.CompilerParams(
            dimension_semantics=("parallel",),
            vmem_limit_bytes=VMEM_LIMIT),
    )(*args)


# ---------------------------------------------------------------------------
# Model: GATConv(F_in,128,H) -> ELU -> GATConv(128H,64,H) -> ELU -> Linear(64H,C)
# ---------------------------------------------------------------------------
class GATModelPallas:

    def __init__(self, num_node_features, num_classes, num_heads=4):
        h = num_heads
        self.heads = h
        self.d1, self.d2 = 128, 64
        self.num_classes = num_classes
        keys = jax.random.split(jax.random.PRNGKey(42), 8)

        def glorot(key, shape):
            fan_in, fan_out = shape[-2], shape[-1]
            lim = (6.0 / (fan_in + fan_out)) ** 0.5
            return jax.random.uniform(key, shape, jnp.float32, -lim, lim)

        # layer 1
        self.w1 = glorot(keys[0], (num_node_features, h * self.d1))
        asrc1 = glorot(keys[1], (h, self.d1))
        adst1 = glorot(keys[2], (h, self.d1))
        self.b1 = jnp.zeros((1, h * self.d1), jnp.float32)
        self.aproj1 = _build_score_proj(asrc1, adst1, h, self.d1)
        self.w1_bf16 = self.w1.astype(jnp.bfloat16)

        # layer 2
        self.w2 = glorot(keys[3], (h * self.d1, h * self.d2))
        asrc2 = glorot(keys[4], (h, self.d2))
        adst2 = glorot(keys[5], (h, self.d2))
        self.b2 = jnp.zeros((1, h * self.d2), jnp.float32)
        self.aproj2 = _build_score_proj(asrc2, adst2, h, self.d2)
        self.w2_bf16 = self.w2.astype(jnp.bfloat16)

        # classifier, lane-padded to 128 columns for a lane-dense fused epilogue
        self.wfc = glorot(keys[6], (h * self.d2, num_classes))
        self.bfc = jnp.zeros((1, num_classes), jnp.float32)
        c_pad = max(LANES, _round_up(num_classes, LANES))
        self.wfc_pad = (jnp.zeros((h * self.d2, c_pad), jnp.float32)
                        .at[:, :num_classes].set(self.wfc).astype(jnp.bfloat16))
        self.bfc_pad = (jnp.zeros((1, c_pad), jnp.float32)
                        .at[:, :num_classes].set(self.bfc))

    def __call__(self, x, edge_index):
        n = x.shape[0]
        n_pad = max(LANES, _round_up(n, LANES))
        row_tile = _pick_row_tile(n_pad)

        # glue: dense int8 adjacency mask (adj[i, j] = 1 iff edge j -> i) + self
        # loops for real nodes. Duplicate edges collapse (consistent with GAT).
        adj = jnp.zeros((n_pad, n_pad), jnp.int8)
        adj = adj.at[edge_index[1], edge_index[0]].set(1)
        idx = jnp.arange(n)
        adj = adj.at[idx, idx].set(1)

        # pad node features to a multiple of 128 rows; padded rows discarded later
        xp = (jnp.zeros((n_pad, x.shape[1]), jnp.float32)
              .at[:n, :].set(x).astype(jnp.bfloat16))

        # layer 1
        xw1, sc1 = gat_transform(xp, self.w1_bf16, self.aproj1, row_tile=row_tile)
        h1 = gat_attention(adj, sc1, xw1, self.b1, heads=self.heads,
                           head_dim=self.d1, row_tile=row_tile)
        # dropout: identity (inference)

        # layer 2 (+ fused ELU + Linear epilogue)
        xw2, sc2 = gat_transform(h1.astype(jnp.bfloat16), self.w2_bf16,
                                 self.aproj2, row_tile=row_tile)
        logits = gat_attention(adj, sc2, xw2, self.b2, heads=self.heads,
                               head_dim=self.d2, row_tile=row_tile,
                               fc_w=self.wfc_pad, fc_b=self.bfc_pad)
        # dropout: identity (inference)
        return logits[:n, :self.num_classes]


if __name__ == "__main__":
    key = jax.random.PRNGKey(0)
    kx, ks, kd = jax.random.split(key, 3)

    num_nodes = 16
    num_node_features = 32
    num_classes = 7          # stand-in for len(unique cmp_code labels)
    num_edges = 48

    x = jax.random.normal(kx, (num_nodes, num_node_features), jnp.float32)
    src = jax.random.randint(ks, (num_edges,), 0, num_nodes)
    dst = jax.random.randint(kd, (num_edges,), 0, num_nodes)
    edge_index = jnp.stack([src, dst], axis=0)          # [2, E]

    model = GATModelPallas(num_node_features, num_classes, num_heads=4)
    out = model(x, edge_index)
    jax.block_until_ready(out)
    assert out.shape == (num_nodes, num_classes)
    assert bool(jnp.all(jnp.isfinite(out)))
    print("KERNEL_OK")
</pallas_src>

<mosaic_0001>
module attributes {stable_mosaic.version = 11 : i64} {
  func.func @_transform_kernel(%arg0: i32, %arg1: memref<128x32xbf16, #tpu.memory_space<vmem>>, %arg2: memref<32x512xbf16, #tpu.memory_space<vmem>>, %arg3: memref<512x128xf32, #tpu.memory_space<vmem>>, %arg4: memref<128x512xbf16, #tpu.memory_space<vmem>>, %arg5: memref<128x128xf32, #tpu.memory_space<vmem>>) attributes {dimension_semantics = [#tpu.dimension_semantics<parallel>], iteration_bounds = array<i64: 1>, scalar_prefetch = 0 : i64, scratch_operands = 0 : i64, tpu.core_type = #tpu.core_type<tc>, window_params = [{transform_indices = @transform_0, window_bounds = array<i64: 128, 32>}, {pipeline_mode = #tpu.pipeline_mode<synchronous>, transform_indices = @transform_1, window_bounds = array<i64: 32, 512>}, {pipeline_mode = #tpu.pipeline_mode<synchronous>, transform_indices = @transform_2, window_bounds = array<i64: 512, 128>}, {transform_indices = @transform_3, window_bounds = array<i64: 128, 512>}, {transform_indices = @transform_4, window_bounds = array<i64: 128, 128>}]} {
    %c0 = arith.constant 0 : index
    %c0_0 = arith.constant 0 : index
    %0 = vector.load %arg1[%c0, %c0_0] : memref<128x32xbf16, #tpu.memory_space<vmem>>, vector<128x32xbf16>
    %c0_1 = arith.constant 0 : index
    %c0_2 = arith.constant 0 : index
    %1 = vector.load %arg2[%c0_1, %c0_2] : memref<32x512xbf16, #tpu.memory_space<vmem>>, vector<32x512xbf16>
    %cst = arith.constant dense<0.000000e+00> : vector<128x512xf32>
    %2 = tpu.matmul %0, %1, %cst {dimension_numbers = #tpu.dot_dimension_numbers<[1], [0], [0], [1], [0, 0, 1, 1], [], []>} : vector<128x32xbf16>, vector<32x512xbf16>, vector<128x512xf32> -> vector<128x512xf32>
    %3 = arith.truncf %2 : vector<128x512xf32> to vector<128x512xbf16>
    %c0_3 = arith.constant 0 : index
    %c0_4 = arith.constant 0 : index
    %4 = vector.load %arg4[%c0_3, %c0_4] : memref<128x512xbf16, #tpu.memory_space<vmem>>, vector<128x512xbf16>
    tpu.vector_store %arg4[%c0_3, %c0_4], %3 {strides = array<i32>} : memref<128x512xbf16, #tpu.memory_space<vmem>>, vector<128x512xbf16>,
    %c0_5 = arith.constant 0 : index
    %c0_6 = arith.constant 0 : index
    %5 = vector.load %arg3[%c0_5, %c0_6] : memref<512x128xf32, #tpu.memory_space<vmem>>, vector<512x128xf32>
    %cst_7 = arith.constant dense<0.000000e+00> : vector<128x128xf32>
    %6 = tpu.matmul %2, %5, %cst_7 {dimension_numbers = #tpu.dot_dimension_numbers<[1], [0], [0], [1], [0, 0, 1, 1], [], []>} : vector<128x512xf32>, vector<512x128xf32>, vector<128x128xf32> -> vector<128x128xf32>
    %c0_8 = arith.constant 0 : index
    %c0_9 = arith.constant 0 : index
    %7 = vector.load %arg5[%c0_8, %c0_9] : memref<128x128xf32, #tpu.memory_space<vmem>>, vector<128x128xf32>
    tpu.vector_store %arg5[%c0_8, %c0_9], %6 {strides = array<i32>} : memref<128x128xf32, #tpu.memory_space<vmem>>, vector<128x128xf32>,
    return
  }
  func.func @transform_0(%arg0: i32) -> (i32, i32) {
    %c0_i32 = arith.constant 0 : i32
    %c0_i32_0 = arith.constant 0 : i32
    return %arg0, %c0_i32 : i32, i32
  }
  func.func @transform_1(%arg0: i32) -> (i32, i32) {
    %c0_i32 = arith.constant 0 : i32
    %c0_i32_0 = arith.constant 0 : i32
    %c0_i32_1 = arith.constant 0 : i32
    return %c0_i32, %c0_i32_0 : i32, i32
  }
  func.func @transform_2(%arg0: i32) -> (i32, i32) {
    %c0_i32 = arith.constant 0 : i32
    %c0_i32_0 = arith.constant 0 : i32
    %c0_i32_1 = arith.constant 0 : i32
    return %c0_i32, %c0_i32_0 : i32, i32
  }
  func.func @transform_3(%arg0: i32) -> (i32, i32) {
    %c0_i32 = arith.constant 0 : i32
    %c0_i32_0 = arith.constant 0 : i32
    return %arg0, %c0_i32 : i32, i32
  }
  func.func @transform_4(%arg0: i32) -> (i32, i32) {
    %c0_i32 = arith.constant 0 : i32
    %c0_i32_0 = arith.constant 0 : i32
    return %arg0, %c0_i32 : i32, i32
  }
}

</mosaic_0001>

<llo_original>
// kernel: tpu_custom_call.1
$region0: #{tpu_custom_call.1}
  #allocation0 [shape = 'u32[]', space=smem, size = 0x4, offset = 0x4, fixed_abs, tag = 'smem constant byte address 0x4 - core index']
  #allocation1 [shape = 'u32[144,128]{1,0:T(1,128)}', space=vmem, size = 0x12000, scoped, tag = 'internal scratch']
  %s0 = inlined_call_operand.vmem [shape: bf16[128,32], index: 0, kind: input, shape index: {}]
  %s1 = inlined_call_operand.vmem [shape: bf16[32,512], index: 1, kind: input, shape index: {}]
  %s2 = inlined_call_operand.hbm [shape: f32[512,128], index: 2, kind: input, shape index: {}]
  %s3 = inlined_call_operand.hbm [shape: bf16[128,512], index: 3, kind: output, shape index: {0}]
  %s4 = inlined_call_operand.hbm [shape: f32[128,128], index: 4, kind: output, shape index: {1}]
  %5 = xla_tuple %s3, %s4
  %s6 = sld [smem:[#allocation0]]
  $region34: #{tpu_custom_call.1} parent=0
    _
  %s8 = ssub.s32 1, %s6
  %s9 = scalar_select 0, %s8, %s6
  $region1: #{tpu_custom_call.1} parent=0
    #allocation2 [shape = 'u8[262144]{0}', space=vmem, size = 0x40000, scoped, tag = 'input window, operand 2, single buffered']
    #allocation3 [shape = 's32[1]{0}', space=sflag, size = 0x4, scoped, tag = 'scoped memory for tpu_custom_call.1']
    #allocation4 [shape = 's32[1]{0}', space=sflag, size = 0x4, scoped, tag = 'scoped memory for tpu_custom_call.1']
    #allocation5 [shape = 'u8[131072]{0}', space=vmem, size = 0x20000, scoped, tag = 'output window, operand 0, single buffered']
    #allocation6 [shape = 'u8[65536]{0}', space=vmem, size = 0x10000, scoped, tag = 'output window, operand 1, single buffered']
    #allocation7 [shape = 's32[1]{0}', space=sflag, size = 0x4, scoped, tag = 'scoped memory for tpu_custom_call.1']
    %10 = vsyncpa [#allocation3], 0
    %11 = vsyncpa [#allocation4], 0
    %12 = vsyncpa [#allocation7], 0
    // Predicated region
    $region2: #{tpu_custom_call.1} parent=1 // pred_check
      _
    $region3: #{tpu_custom_call.1} parent=1 // pred_check_branch
      %14 = sbr.rel (0) target = $region5
    $region4: #{tpu_custom_call.1} parent=1 // pred_region
      _
    $region5: #{tpu_custom_call.1} parent=1 // pred_fallthru
      _
    // Predicated region
    $region6: #{tpu_custom_call.1} parent=1 // pred_check
      _
    $region7: #{tpu_custom_call.1} parent=1 // pred_check_branch
      %16 = sbr.rel (0) target = $region9
    $region8: #{tpu_custom_call.1} parent=1 // pred_region
      _
    $region9: #{tpu_custom_call.1} parent=1 // pred_fallthru
      _
    // Predicated region
    $region10: #{tpu_custom_call.1} parent=1 // pred_check
      _
    $region11: #{tpu_custom_call.1} parent=1 // pred_check_branch
      %18 = sbr.rel (0) target = $region13
    $region12: #{tpu_custom_call.1} parent=1 // pred_region
      %s20 = ssub.s32 8192, 8192
      %21 = vsyncadd [#allocation3], %s20
      %s22 = sshll.u32 [#allocation2], 4
      %s23 = int_to_ptr.vmem [resolvable:$true] %s22
      %28 = dma.hbm_to_vmem [thread:$0]  %s2, 8192, %s23, [#allocation3], 128, 128, 8
    $region13: #{tpu_custom_call.1} parent=1 // pred_fallthru
      _
    // Predicated region
    $region14: #{tpu_custom_call.1} parent=1 // pred_check
      _
    $region15: #{tpu_custom_call.1} parent=1 // pred_check_branch
      %30 = sbr.rel (0) target = $region17
    $region16: #{tpu_custom_call.1} parent=1 // pred_region
      %31 = dma.done [#allocation3], 8192
    $region17: #{tpu_custom_call.1} parent=1 // pred_fallthru
      _
    %v33 = vld [vmem:[%s0] sm:$0xf]
    %v34 = vld [vmem:[%s0 + $0x4] sm:$0xf]
    %v35 = vld [vmem:[%s0 + $0x8] sm:$0xf]
    %v36 = vld [vmem:[%s0 + $0xc] sm:$0xf]
    %v37 = vld [vmem:[%s0 + $0x10] sm:$0xf]
    %v38 = vld [vmem:[%s0 + $0x14] sm:$0xf]
    %v39 = vld [vmem:[%s0 + $0x18] sm:$0xf]
    %v40 = vld [vmem:[%s0 + $0x1c] sm:$0xf]
    %v41 = vld [vmem:[%s0 + $0x20] sm:$0xf]
    %v42 = vld [vmem:[%s0 + $0x24] sm:$0xf]
    %v43 = vld [vmem:[%s0 + $0x28] sm:$0xf]
    %v44 = vld [vmem:[%s0 + $0x2c] sm:$0xf]
    %v45 = vld [vmem:[%s0 + $0x30] sm:$0xf]
    %v46 = vld [vmem:[%s0 + $0x34] sm:$0xf]
    %v47 = vld [vmem:[%s0 + $0x38] sm:$0xf]
    %v48 = vld [vmem:[%s0 + $0x3c] sm:$0xf]
    %v49 = vld [vmem:[%s1] sm:$0xff]
    %v50 = vld [vmem:[%s1 + $0x8] sm:$0xff]
    %v51 = vld [vmem:[%s1 + $0x10] sm:$0xff]
    %v52 = vld [vmem:[%s1 + $0x18] sm:$0xff]
    %v53 = vld [vmem:[%s1 + $0x20] sm:$0xff]
    %v54 = vld [vmem:[%s1 + $0x28] sm:$0xff]
    %v55 = vld [vmem:[%s1 + $0x30] sm:$0xff]
    %v56 = vld [vmem:[%s1 + $0x38] sm:$0xff]
    %v73 = vunpack.c.l.b16 %v33
    %v74 = vunpack.c.l.b16 %v34
    %v75 = vunpack.c.l.b16 %v35
    %v76 = vunpack.c.l.b16 %v36
    %v77 = vunpack.c.l.b16 %v37
    %v78 = vunpack.c.l.b16 %v38
    %v79 = vunpack.c.l.b16 %v39
    %v80 = vunpack.c.l.b16 %v40
    %v81 = vunpack.c.l.b16 %v41
    %v82 = vunpack.c.l.b16 %v42
    %v83 = vunpack.c.l.b16 %v43
    %v84 = vunpack.c.l.b16 %v44
    %v85 = vunpack.c.l.b16 %v45
    %v86 = vunpack.c.l.b16 %v46
    %v87 = vunpack.c.l.b16 %v47
    %v88 = vunpack.c.l.b16 %v48
    %v89 = vpack.c.b16 %v74, %v73
    %v90 = vpack.c.b16 %v76, %v75
    %v91 = vpack.c.b16 %v78, %v77
    %v92 = vpack.c.b16 %v80, %v79
    %v93 = vpack.c.b16 %v82, %v81
    %v94 = vpack.c.b16 %v84, %v83
    %v95 = vpack.c.b16 %v86, %v85
    %v96 = vpack.c.b16 %v88, %v87
    %v105 = vunpack.c.l.b16 %v49
    %v106 = vunpack.c.h.b16 %v49
    %v107 = vunpack.c.l.b16 %v50
    %v108 = vunpack.c.h.b16 %v50
    %v109 = vunpack.c.l.b16 %v51
    %v110 = vunpack.c.h.b16 %v51
    %v111 = vunpack.c.l.b16 %v52
    %v112 = vunpack.c.h.b16 %v52
    %v113 = vunpack.c.l.b16 %v53
    %v114 = vunpack.c.h.b16 %v53
    %v115 = vunpack.c.l.b16 %v54
    %v116 = vunpack.c.h.b16 %v54
    %v117 = vunpack.c.l.b16 %v55
    %v118 = vunpack.c.h.b16 %v55
    %v119 = vunpack.c.l.b16 %v56
    %v120 = vunpack.c.h.b16 %v56
    %v121 = vpack.c.b16 %v109, %v105
    %v122 = vpack.c.b16 %v110, %v106
    %v123 = vpack.c.b16 %v111, %v107
    %v124 = vpack.c.b16 %v112, %v108
    %v125 = vpack.c.b16 %v117, %v113
    %v126 = vpack.c.b16 %v118, %v114
    %v127 = vpack.c.b16 %v119, %v115
    %v128 = vpack.c.b16 %v120, %v116
    %vm137 = vcmask 261120
    %v139 = vsel %vm137, %v89, 0
    %v142 = vsel %vm137, %v90, 0
    %v145 = vsel %vm137, %v91, 0
    %v148 = vsel %vm137, %v92, 0
    %v151 = vsel %vm137, %v93, 0
    %v154 = vsel %vm137, %v94, 0
    %v157 = vsel %vm137, %v95, 0
    %v160 = vsel %vm137, %v96, 0
    %162 = vmatprep.subr.bf16.mxu0 0
    %163 = vmatpush1.bf16.msra.mxu0 0
    %164 = vmatprep.subr.bf16.mxu0 0
    %165 = vmatpush1.bf16.msra.mxu0 0
    %166 = vmatprep.subr.bf16.mxu0 0
    %167 = vmatpush1.bf16.msra.mxu0 0
    %168 = vmatprep.subr.bf16.mxu0 0
    %169 = vmatpush1.bf16.msra.mxu0 0
    %170 = vmatprep.subr.bf16.mxu0 0
    %171 = vmatpush1.bf16.msra.mxu0 0
    %172 = vmatprep.subr.bf16.mxu0 0
    %173 = vmatpush1.bf16.msra.mxu0 0
    %174 = vmatprep.subr.bf16.mxu0 %v126
    %175 = vmatpush1.bf16.msra.mxu0 %v125
    %176 = vmatprep.subr.bf16.mxu0 %v122
    %177 = vmatpush1.bf16.msra.mxu0 %v121
    %178 = vmatprep.subr.bf16.mxu0 0
    %179 = vmatpush2.bf16.msra.mxu0 0
    %180 = vmatprep.subr.bf16.mxu0 0
    %181 = vmatpush2.bf16.msra.mxu0 0
    %182 = vmatprep.subr.bf16.mxu0 0
    %183 = vmatpush2.bf16.msra.mxu0 0
    %184 = vmatprep.subr.bf16.mxu0 0
    %185 = vmatpush2.bf16.msra.mxu0 0
    %186 = vmatprep.subr.bf16.mxu0 0
    %187 = vmatpush2.bf16.msra.mxu0 0
    %188 = vmatprep.subr.bf16.mxu0 0
    %189 = vmatpush2.bf16.msra.mxu0 0
    %190 = vmatprep.subr.bf16.mxu0 0
    %191 = vmatpush2.bf16.msra.mxu0 0
    %192 = vmatprep.subr.bf16.mxu0 0
    %193 = vmatpush2.bf16.msra.mxu0 0
    %194 = vmatprep.mubr.bf16.mxu0 0
    %195 = vmatmul.mubr.bf16.gmra.mxu0 %v139
    %v196 = vpop.f32.mrf.mxu0
    %v197 = vadd.f32 0.0, %v196
    %v198 = vpop.f32.mrf.mxu0
    %v199 = vadd.f32 0.0, %v198
    %v200 = vpop.f32.mrf.mxu0
    %v201 = vadd.f32 0.0, %v200
    %v202 = vpop.f32.mrf.mxu0
    %v203 = vadd.f32 0.0, %v202
    %204 = vmatprep.mubr.bf16.mxu0 0
    %205 = vmatmul.mubr.bf16.gmra.mxu0 %v142
    %v206 = vpop.f32.mrf.mxu0
    %v207 = vadd.f32 0.0, %v206
    %v208 = vpop.f32.mrf.mxu0
    %v209 = vadd.f32 0.0, %v208
    %v210 = vpop.f32.mrf.mxu0
    %v211 = vadd.f32 0.0, %v210
    %v212 = vpop.f32.mrf.mxu0
    %v213 = vadd.f32 0.0, %v212
    %214 = vmatprep.mubr.bf16.mxu0 0
    %215 = vmatmul.mubr.bf16.gmra.mxu0 %v145
    %v216 = vpop.f32.mrf.mxu0
    %v217 = vadd.f32 0.0, %v216
    %v218 = vpop.f32.mrf.mxu0
    %v219 = vadd.f32 0.0, %v218
    %v220 = vpop.f32.mrf.mxu0
    %v221 = vadd.f32 0.0, %v220
    %v222 = vpop.f32.mrf.mxu0
    %v223 = vadd.f32 0.0, %v222
    %224 = vmatprep.mubr.bf16.mxu0 0
    %225 = vmatmul.mubr.bf16.gmra.mxu0 %v148
    %v226 = vpop.f32.mrf.mxu0
    %v227 = vadd.f32 0.0, %v226
    %v228 = vpop.f32.mrf.mxu0
    %v229 = vadd.f32 0.0, %v228
    %v230 = vpop.f32.mrf.mxu0
    %v231 = vadd.f32 0.0, %v230
    %v232 = vpop.f32.mrf.mxu0
    %v233 = vadd.f32 0.0, %v232
    %234 = vmatprep.mubr.bf16.mxu0 0
    %235 = vmatmul.mubr.bf16.gmra.mxu0 %v151
    %v236 = vpop.f32.mrf.mxu0
    %v237 = vadd.f32 0.0, %v236
    %v238 = vpop.f32.mrf.mxu0
    %v239 = vadd.f32 0.0, %v238
    %v240 = vpop.f32.mrf.mxu0
    %v241 = vadd.f32 0.0, %v240
    %v242 = vpop.f32.mrf.mxu0
    %v243 = vadd.f32 0.0, %v242
    %244 = vmatprep.mubr.bf16.mxu0 0
    %245 = vmatmul.mubr.bf16.gmra.mxu0 %v154
    %v246 = vpop.f32.mrf.mxu0
    %v247 = vadd.f32 0.0, %v246
    %v248 = vpop.f32.mrf.mxu0
    %v249 = vadd.f32 0.0, %v248
    %v250 = vpop.f32.mrf.mxu0
    %v251 = vadd.f32 0.0, %v250
    %v252 = vpop.f32.mrf.mxu0
    %v253 = vadd.f32 0.0, %v252
    %254 = vmatprep.mubr.bf16.mxu0 0
    %255 = vmatmul.mubr.bf16.gmra.mxu0 %v157
    %v256 = vpop.f32.mrf.mxu0
    %v257 = vadd.f32 0.0, %v256
    %v258 = vpop.f32.mrf.mxu0
    %v259 = vadd.f32 0.0, %v258
    %v260 = vpop.f32.mrf.mxu0
    %v261 = vadd.f32 0.0, %v260
    %v262 = vpop.f32.mrf.mxu0
    %v263 = vadd.f32 0.0, %v262
    %264 = vmatprep.mubr.bf16.mxu0 0
    %265 = vmatmul.mubr.bf16.gmra.mxu0 %v160
    %v266 = vpop.f32.mrf.mxu0
    %v267 = vadd.f32 0.0, %v266
    %v268 = vpop.f32.mrf.mxu0
    %v269 = vadd.f32 0.0, %v268
    %v270 = vpop.f32.mrf.mxu0
    %v271 = vadd.f32 0.0, %v270
    %v272 = vpop.f32.mrf.mxu0
    %v273 = vadd.f32 0.0, %v272
    %274 = vdwg.mxu0
    %275 = vmatprep.subr.bf16.mxu0 0
    %276 = vmatpush1.bf16.msra.mxu0 0
    %277 = vmatprep.subr.bf16.mxu0 0
    %278 = vmatpush1.bf16.msra.mxu0 0
    %279 = vmatprep.subr.bf16.mxu0 0
    %280 = vmatpush1.bf16.msra.mxu0 0
    %281 = vmatprep.subr.bf16.mxu0 0
    %282 = vmatpush1.bf16.msra.mxu0 0
    %283 = vmatprep.subr.bf16.mxu0 0
    %284 = vmatpush1.bf16.msra.mxu0 0
    %285 = vmatprep.subr.bf16.mxu0 0
    %286 = vmatpush1.bf16.msra.mxu0 0
    %287 = vmatprep.subr.bf16.mxu0 %v128
    %288 = vmatpush1.bf16.msra.mxu0 %v127
    %289 = vmatprep.subr.bf16.mxu0 %v124
    %290 = vmatpush1.bf16.msra.mxu0 %v123
    %291 = vmatprep.subr.bf16.mxu0 0
    %292 = vmatpush2.bf16.msra.mxu0 0
    %293 = vmatprep.subr.bf16.mxu0 0
    %294 = vmatpush2.bf16.msra.mxu0 0
    %295 = vmatprep.subr.bf16.mxu0 0
    %296 = vmatpush2.bf16.msra.mxu0 0
    %297 = vmatprep.subr.bf16.mxu0 0
    %298 = vmatpush2.bf16.msra.mxu0 0
    %299 = vmatprep.subr.bf16.mxu0 0
    %300 = vmatpush2.bf16.msra.mxu0 0
    %301 = vmatprep.subr.bf16.mxu0 0
    %302 = vmatpush2.bf16.msra.mxu0 0
    %303 = vmatprep.subr.bf16.mxu0 0
    %304 = vmatpush2.bf16.msra.mxu0 0
    %305 = vmatprep.subr.bf16.mxu0 0
    %306 = vmatpush2.bf16.msra.mxu0 0
    %307 = vmatprep.mubr.bf16.mxu0 0
    %308 = vmatmul.mubr.bf16.gmra.mxu0 %v139
    %v309 = vpop.f32.mrf.mxu0
    %v310 = vadd.f32 0.0, %v309
    %v311 = vpop.f32.mrf.mxu0
    %v312 = vadd.f32 0.0, %v311
    %v313 = vpop.f32.mrf.mxu0
    %v314 = vadd.f32 0.0, %v313
    %v315 = vpop.f32.mrf.mxu0
    %v316 = vadd.f32 0.0, %v315
    %317 = vmatprep.mubr.bf16.mxu0 0
    %318 = vmatmul.mubr.bf16.gmra.mxu0 %v142
    %v319 = vpop.f32.mrf.mxu0
    %v320 = vadd.f32 0.0, %v319
    %v321 = vpop.f32.mrf.mxu0
    %v322 = vadd.f32 0.0, %v321
    %v323 = vpop.f32.mrf.mxu0
    %v324 = vadd.f32 0.0, %v323
    %v325 = vpop.f32.mrf.mxu0
    %v326 = vadd.f32 0.0, %v325
    %327 = vmatprep.mubr.bf16.mxu0 0
    %328 = vmatmul.mubr.bf16.gmra.mxu0 %v145
    %v329 = vpop.f32.mrf.mxu0
    %v330 = vadd.f32 0.0, %v329
    %v331 = vpop.f32.mrf.mxu0
    %v332 = vadd.f32 0.0, %v331
    %v333 = vpop.f32.mrf.mxu0
    %v334 = vadd.f32 0.0, %v333
    %v335 = vpop.f32.mrf.mxu0
    %v336 = vadd.f32 0.0, %v335
    %337 = vmatprep.mubr.bf16.mxu0 0
    %338 = vmatmul.mubr.bf16.gmra.mxu0 %v148
    %v339 = vpop.f32.mrf.mxu0
    %v340 = vadd.f32 0.0, %v339
    %v341 = vpop.f32.mrf.mxu0
    %v342 = vadd.f32 0.0, %v341
    %v343 = vpop.f32.mrf.mxu0
    %v344 = vadd.f32 0.0, %v343
    %v345 = vpop.f32.mrf.mxu0
    %v346 = vadd.f32 0.0, %v345
    %347 = vmatprep.mubr.bf16.mxu0 0
    %348 = vmatmul.mubr.bf16.gmra.mxu0 %v151
    %v349 = vpop.f32.mrf.mxu0
    %v350 = vadd.f32 0.0, %v349
    %v351 = vpop.f32.mrf.mxu0
    %v352 = vadd.f32 0.0, %v351
    %v353 = vpop.f32.mrf.mxu0
    %v354 = vadd.f32 0.0, %v353
    %v355 = vpop.f32.mrf.mxu0
    %v356 = vadd.f32 0.0, %v355
    %357 = vmatprep.mubr.bf16.mxu0 0
    %358 = vmatmul.mubr.bf16.gmra.mxu0 %v154
    %v359 = vpop.f32.mrf.mxu0
    %v360 = vadd.f32 0.0, %v359
    %v361 = vpop.f32.mrf.mxu0
    %v362 = vadd.f32 0.0, %v361
    %v363 = vpop.f32.mrf.mxu0
    %v364 = vadd.f32 0.0, %v363
    %v365 = vpop.f32.mrf.mxu0
    %v366 = vadd.f32 0.0, %v365
    %367 = vmatprep.mubr.bf16.mxu0 0
    %368 = vmatmul.mubr.bf16.gmra.mxu0 %v157
    %v369 = vpop.f32.mrf.mxu0
    %v370 = vadd.f32 0.0, %v369
    %v371 = vpop.f32.mrf.mxu0
    %v372 = vadd.f32 0.0, %v371
    %v373 = vpop.f32.mrf.mxu0
    %v374 = vadd.f32 0.0, %v373
    %v375 = vpop.f32.mrf.mxu0
    %v376 = vadd.f32 0.0, %v375
    %377 = vmatprep.mubr.bf16.mxu0 0
    %378 = vmatmul.mubr.bf16.gmra.mxu0 %v160
    %v379 = vpop.f32.mrf.mxu0
    %v380 = vadd.f32 0.0, %v379
    %v381 = vpop.f32.mrf.mxu0
    %v382 = vadd.f32 0.0, %v381
    %v383 = vpop.f32.mrf.mxu0
    %v384 = vadd.f32 0.0, %v383
    %v385 = vpop.f32.mrf.mxu0
    %v386 = vadd.f32 0.0, %v385
    %387 = vdwg.mxu0
    %v388 = vpack.c.bf16 %v201, %v197
    %v389 = vpack.c.bf16 %v203, %v199
    %v390 = vpack.c.bf16 %v314, %v310
    %v391 = vpack.c.bf16 %v316, %v312
    %v392 = vpack.c.bf16 %v211, %v207
    %v393 = vpack.c.bf16 %v213, %v209
    %v394 = vpack.c.bf16 %v324, %v320
    %v395 = vpack.c.bf16 %v326, %v322
    %v396 = vpack.c.bf16 %v221, %v217
    %v397 = vpack.c.bf16 %v223, %v219
    %v398 = vpack.c.bf16 %v334, %v330
    %v399 = vpack.c.bf16 %v336, %v332
    %v400 = vpack.c.bf16 %v231, %v227
    %v401 = vpack.c.bf16 %v233, %v229
    %v402 = vpack.c.bf16 %v344, %v340
    %v403 = vpack.c.bf16 %v346, %v342
    %v404 = vpack.c.bf16 %v241, %v237
    %v405 = vpack.c.bf16 %v243, %v239
    %v406 = vpack.c.bf16 %v354, %v350
    %v407 = vpack.c.bf16 %v356, %v352
    %v408 = vpack.c.bf16 %v251, %v247
    %v409 = vpack.c.bf16 %v253, %v249
    %v410 = vpack.c.bf16 %v364, %v360
    %v411 = vpack.c.bf16 %v366, %v362
    %v412 = vpack.c.bf16 %v261, %v257
    %v413 = vpack.c.bf16 %v263, %v259
    %v414 = vpack.c.bf16 %v374, %v370
    %v415 = vpack.c.bf16 %v376, %v372
    %v416 = vpack.c.bf16 %v271, %v267
    %v417 = vpack.c.bf16 %v273, %v269
    %v418 = vpack.c.bf16 %v384, %v380
    %v419 = vpack.c.bf16 %v386, %v382
    %v452 = vunpack.c.l.b16 %v388
    %v453 = vunpack.c.l.b16 %v389
    %v454 = vunpack.c.l.b16 %v390
    %v455 = vunpack.c.l.b16 %v391
    %v456 = vunpack.c.h.b16 %v388
    %v457 = vunpack.c.h.b16 %v389
    %v458 = vunpack.c.h.b16 %v390
    %v459 = vunpack.c.h.b16 %v391
    %v460 = vunpack.c.l.b16 %v392
    %v461 = vunpack.c.l.b16 %v393
    %v462 = vunpack.c.l.b16 %v394
    %v463 = vunpack.c.l.b16 %v395
    %v464 = vunpack.c.h.b16 %v392
    %v465 = vunpack.c.h.b16 %v393
    %v466 = vunpack.c.h.b16 %v394
    %v467 = vunpack.c.h.b16 %v395
    %v468 = vunpack.c.l.b16 %v396
    %v469 = vunpack.c.l.b16 %v397
    %v470 = vunpack.c.l.b16 %v398
    %v471 = vunpack.c.l.b16 %v399
    %v472 = vunpack.c.h.b16 %v396
    %v473 = vunpack.c.h.b16 %v397
    %v474 = vunpack.c.h.b16 %v398
    %v475 = vunpack.c.h.b16 %v399
    %v476 = vunpack.c.l.b16 %v400
    %v477 = vunpack.c.l.b16 %v401
    %v478 = vunpack.c.l.b16 %v402
    %v479 = vunpack.c.l.b16 %v403
    %v480 = vunpack.c.h.b16 %v400
    %v481 = vunpack.c.h.b16 %v401
    %v482 = vunpack.c.h.b16 %v402
    %v483 = vunpack.c.h.b16 %v403
    %v484 = vunpack.c.l.b16 %v404
    %v485 = vunpack.c.l.b16 %v405
    %v486 = vunpack.c.l.b16 %v406
    %v487 = vunpack.c.l.b16 %v407
    %v488 = vunpack.c.h.b16 %v404
    %v489 = vunpack.c.h.b16 %v405
    %v490 = vunpack.c.h.b16 %v406
    %v491 = vunpack.c.h.b16 %v407
    %v492 = vunpack.c.l.b16 %v408
    %v493 = vunpack.c.l.b16 %v409
    %v494 = vunpack.c.l.b16 %v410
    %v495 = vunpack.c.l.b16 %v411
    %v496 = vunpack.c.h.b16 %v408
    %v497 = vunpack.c.h.b16 %v409
    %v498 = vunpack.c.h.b16 %v410
    %v499 = vunpack.c.h.b16 %v411
    %v500 = vunpack.c.l.b16 %v412
    %v501 = vunpack.c.l.b16 %v413
    %v502 = vunpack.c.l.b16 %v414
    %v503 = vunpack.c.l.b16 %v415
    %v504 = vunpack.c.h.b16 %v412
    %v505 = vunpack.c.h.b16 %v413
    %v506 = vunpack.c.h.b16 %v414
    %v507 = vunpack.c.h.b16 %v415
    %v508 = vunpack.c.l.b16 %v416
    %v509 = vunpack.c.l.b16 %v417
    %v510 = vunpack.c.l.b16 %v418
    %v511 = vunpack.c.l.b16 %v419
    %v512 = vunpack.c.h.b16 %v416
    %v513 = vunpack.c.h.b16 %v417
    %v514 = vunpack.c.h.b16 %v418
    %v515 = vunpack.c.h.b16 %v419
    %v516 = vpack.c.b16 %v453, %v452
    %v517 = vpack.c.b16 %v455, %v454
    %v518 = vpack.c.b16 %v457, %v456
    %v519 = vpack.c.b16 %v459, %v458
    %v520 = vpack.c.b16 %v461, %v460
    %v521 = vpack.c.b16 %v463, %v462
    %v522 = vpack.c.b16 %v465, %v464
    %v523 = vpack.c.b16 %v467, %v466
    %v524 = vpack.c.b16 %v469, %v468
    %v525 = vpack.c.b16 %v471, %v470
    %v526 = vpack.c.b16 %v473, %v472
    %v527 = vpack.c.b16 %v475, %v474
    %v528 = vpack.c.b16 %v477, %v476
    %v529 = vpack.c.b16 %v479, %v478
    %v530 = vpack.c.b16 %v481, %v480
    %v531 = vpack.c.b16 %v483, %v482
    %v532 = vpack.c.b16 %v485, %v484
    %v533 = vpack.c.b16 %v487, %v486
    %v534 = vpack.c.b16 %v489, %v488
    %v535 = vpack.c.b16 %v491, %v490
    %v536 = vpack.c.b16 %v493, %v492
    %v537 = vpack.c.b16 %v495, %v494
    %v538 = vpack.c.b16 %v497, %v496
    %v539 = vpack.c.b16 %v499, %v498
    %v540 = vpack.c.b16 %v501, %v500
    %v541 = vpack.c.b16 %v503, %v502
    %v542 = vpack.c.b16 %v505, %v504
    %v543 = vpack.c.b16 %v507, %v506
    %v544 = vpack.c.b16 %v509, %v508
    %v545 = vpack.c.b16 %v511, %v510
    %v546 = vpack.c.b16 %v513, %v512
    %v547 = vpack.c.b16 %v515, %v514
    %580 = vst [vmem:[#allocation5] sm:$0xff] %v516
    %581 = vst [vmem:[#allocation5 + $0x8] sm:$0xff] %v517
    %582 = vst [vmem:[#allocation5 + $0x10] sm:$0xff] %v518
    %583 = vst [vmem:[#allocation5 + $0x18] sm:$0xff] %v519
    %584 = vst [vmem:[#allocation5 + $0x20] sm:$0xff] %v520
    %585 = vst [vmem:[#allocation5 + $0x28] sm:$0xff] %v521
    %586 = vst [vmem:[#allocation5 + $0x30] sm:$0xff] %v522
    %587 = vst [vmem:[#allocation5 + $0x38] sm:$0xff] %v523
    %588 = vst [vmem:[#allocation5 + $0x40] sm:$0xff] %v524
    %589 = vst [vmem:[#allocation5 + $0x48] sm:$0xff] %v525
    %590 = vst [vmem:[#allocation5 + $0x50] sm:$0xff] %v526
    %591 = vst [vmem:[#allocation5 + $0x58] sm:$0xff] %v527
    %592 = vst [vmem:[#allocation5 + $0x60] sm:$0xff] %v528
    %593 = vst [vmem:[#allocation5 + $0x68] sm:$0xff] %v529
    %594 = vst [vmem:[#allocation5 + $0x70] sm:$0xff] %v530
    %595 = vst [vmem:[#allocation5 + $0x78] sm:$0xff] %v531
    %596 = vst [vmem:[#allocation5 + $0x80] sm:$0xff] %v532
    %597 = vst [vmem:[#allocation5 + $0x88] sm:$0xff] %v533
    %598 = vst [vmem:[#allocation5 + $0x90] sm:$0xff] %v534
    %599 = vst [vmem:[#allocation5 + $0x98] sm:$0xff] %v535
    %600 = vst [vmem:[#allocation5 + $0xa0] sm:$0xff] %v536
    %601 = vst [vmem:[#allocation5 + $0xa8] sm:$0xff] %v537
    %602 = vst [vmem:[#allocation5 + $0xb0] sm:$0xff] %v538
    %603 = vst [vmem:[#allocation5 + $0xb8] sm:$0xff] %v539
    %604 = vst [vmem:[#allocation5 + $0xc0] sm:$0xff] %v540
    %605 = vst [vmem:[#allocation5 + $0xc8] sm:$0xff] %v541
    %606 = vst [vmem:[#allocation5 + $0xd0] sm:$0xff] %v542
    %607 = vst [vmem:[#allocation5 + $0xd8] sm:$0xff] %v543
    %608 = vst [vmem:[#allocation5 + $0xe0] sm:$0xff] %v544
    %609 = vst [vmem:[#allocation5 + $0xe8] sm:$0xff] %v545
    %610 = vst [vmem:[#allocation5 + $0xf0] sm:$0xff] %v546
    %611 = vst [vmem:[#allocation5 + $0xf8] sm:$0xff] %v547
    %v612 = vld [vmem:[#allocation2] sm:$0xff]
    %v613 = vld [vmem:[#allocation2 + $0x8] sm:$0xff]
    %v614 = vld [vmem:[#allocation2 + $0x10] sm:$0xff]
    %v615 = vld [vmem:[#allocation2 + $0x18] sm:$0xff]
    %v616 = vld [vmem:[#allocation2 + $0x20] sm:$0xff]
    %v617 = vld [vmem:[#allocation2 + $0x28] sm:$0xff]
    %v618 = vld [vmem:[#allocation2 + $0x30] sm:$0xff]
    %v619 = vld [vmem:[#allocation2 + $0x38] sm:$0xff]
    %v620 = vld [vmem:[#allocation2 + $0x40] sm:$0xff]
    %v621 = vld [vmem:[#allocation2 + $0x48] sm:$0xff]
    %v622 = vld [vmem:[#allocation2 + $0x50] sm:$0xff]
    %v623 = vld [vmem:[#allocation2 + $0x58] sm:$0xff]
    %v624 = vld [vmem:[#allocation2 + $0x60] sm:$0xff]
    %v625 = vld [vmem:[#allocation2 + $0x68] sm:$0xff]
    %v626 = vld [vmem:[#allocation2 + $0x70] sm:$0xff]
    %v627 = vld [vmem:[#allocation2 + $0x78] sm:$0xff]
    %v628 = vld [vmem:[#allocation2 + $0x80] sm:$0xff]
    %v629 = vld [vmem:[#allocation2 + $0x88] sm:$0xff]
    %v630 = vld [vmem:[#allocation2 + $0x90] sm:$0xff]
    %v631 = vld [vmem:[#allocation2 + $0x98] sm:$0xff]
    %v632 = vld [vmem:[#allocation2 + $0xa0] sm:$0xff]
    %v633 = vld [vmem:[#allocation2 + $0xa8] sm:$0xff]
    %v634 = vld [vmem:[#allocation2 + $0xb0] sm:$0xff]
    %v635 = vld [vmem:[#allocation2 + $0xb8] sm:$0xff]
    %v636 = vld [vmem:[#allocation2 + $0xc0] sm:$0xff]
    %v637 = vld [vmem:[#allocation2 + $0xc8] sm:$0xff]
    %v638 = vld [vmem:[#allocation2 + $0xd0] sm:$0xff]
    %v639 = vld [vmem:[#allocation2 + $0xd8] sm:$0xff]
    %v640 = vld [vmem:[#allocation2 + $0xe0] sm:$0xff]
    %v641 = vld [vmem:[#allocation2 + $0xe8] sm:$0xff]
    %v642 = vld [vmem:[#allocation2 + $0xf0] sm:$0xff]
    %v643 = vld [vmem:[#allocation2 + $0xf8] sm:$0xff]
    %v644 = vld [vmem:[#allocation2 + $0x100] sm:$0xff]
    %v645 = vld [vmem:[#allocation2 + $0x108] sm:$0xff]
    %v646 = vld [vmem:[#allocation2 + $0x110] sm:$0xff]
    %v647 = vld [vmem:[#allocation2 + $0x118] sm:$0xff]
    %v648 = vld [vmem:[#allocation2 + $0x120] sm:$0xff]
    %v649 = vld [vmem:[#allocation2 + $0x128] sm:$0xff]
    %v650 = vld [vmem:[#allocation2 + $0x130] sm:$0xff]
    %v651 = vld [vmem:[#allocation2 + $0x138] sm:$0xff]
    %v652 = vld [vmem:[#allocation2 + $0x140] sm:$0xff]
    %v653 = vld [vmem:[#allocation2 + $0x148] sm:$0xff]
    %v654 = vld [vmem:[#allocation2 + $0x150] sm:$0xff]
    %v655 = vld [vmem:[#allocation2 + $0x158] sm:$0xff]
    %v656 = vld [vmem:[#allocation2 + $0x160] sm:$0xff]
    %v657 = vld [vmem:[#allocation2 + $0x168] sm:$0xff]
    %v658 = vld [vmem:[#allocation2 + $0x170] sm:$0xff]
    %v659 = vld [vmem:[#allocation2 + $0x178] sm:$0xff]
    %v660 = vld [vmem:[#allocation2 + $0x180] sm:$0xff]
    %v661 = vld [vmem:[#allocation2 + $0x188] sm:$0xff]
    %v662 = vld [vmem:[#allocation2 + $0x190] sm:$0xff]
    %v663 = vld [vmem:[#allocation2 + $0x198] sm:$0xff]
    %v664 = vld [vmem:[#allocation2 + $0x1a0] sm:$0xff]
    %v665 = vld [vmem:[#allocation2 + $0x1a8] sm:$0xff]
    %v666 = vld [vmem:[#allocation2 + $0x1b0] sm:$0xff]
    %v667 = vld [vmem:[#allocation2 + $0x1b8] sm:$0xff]
    %v668 = vld [vmem:[#allocation2 + $0x1c0] sm:$0xff]
    %v669 = vld [vmem:[#allocation2 + $0x1c8] sm:$0xff]
    %v670 = vld [vmem:[#allocation2 + $0x1d0] sm:$0xff]
    %v671 = vld [vmem:[#allocation2 + $0x1d8] sm:$0xff]
    %v672 = vld [vmem:[#allocation2 + $0x1e0] sm:$0xff]
    %v673 = vld [vmem:[#allocation2 + $0x1e8] sm:$0xff]
    %v674 = vld [vmem:[#allocation2 + $0x1f0] sm:$0xff]
    %v675 = vld [vmem:[#allocation2 + $0x1f8] sm:$0xff]
    %676 = vmatprep.subr.mxu0 0.0
    %677 = vmatpush1.msra.mxu0 %v627
    %678 = vmatprep.subr.mxu0 0.0
    %679 = vmatpush1.msra.mxu0 %v626
    %680 = vmatprep.subr.mxu0 0.0
    %681 = vmatpush1.msra.mxu0 %v625
    %682 = vmatprep.subr.mxu0 0.0
    %683 = vmatpush1.msra.mxu0 %v624
    %684 = vmatprep.subr.mxu0 0.0
    %685 = vmatpush1.msra.mxu0 %v623
    %686 = vmatprep.subr.mxu0 0.0
    %687 = vmatpush1.msra.mxu0 %v622
    %688 = vmatprep.subr.mxu0 0.0
    %689 = vmatpush1.msra.mxu0 %v621
    %690 = vmatprep.subr.mxu0 0.0
    %691 = vmatpush1.msra.mxu0 %v620
    %692 = vmatprep.subr.mxu0 0.0
    %693 = vmatpush1.msra.mxu0 %v619
    %694 = vmatprep.subr.mxu0 0.0
    %695 = vmatpush1.msra.mxu0 %v618
    %696 = vmatprep.subr.mxu0 0.0
    %697 = vmatpush1.msra.mxu0 %v617
    %698 = vmatprep.subr.mxu0 0.0
    %699 = vmatpush1.msra.mxu0 %v616
    %700 = vmatprep.subr.mxu0 0.0
    %701 = vmatpush1.msra.mxu0 %v615
    %702 = vmatprep.subr.mxu0 0.0
    %703 = vmatpush1.msra.mxu0 %v614
    %704 = vmatprep.subr.mxu0 0.0
    %705 = vmatpush1.msra.mxu0 %v613
    %706 = vmatprep.subr.mxu0 0.0
    %707 = vmatpush1.msra.mxu0 %v612
    %708 = vmatprep.subr.mxu0 0.0
    %709 = vmatpush2.msra.mxu0 %v643
    %710 = vmatprep.subr.mxu0 0.0
    %711 = vmatpush2.msra.mxu0 %v642
    %712 = vmatprep.subr.mxu0 0.0
    %713 = vmatpush2.msra.mxu0 %v641
    %714 = vmatprep.subr.mxu0 0.0
    %715 = vmatpush2.msra.mxu0 %v640
    %716 = vmatprep.subr.mxu0 0.0
    %717 = vmatpush2.msra.mxu0 %v639
    %718 = vmatprep.subr.mxu0 0.0
    %719 = vmatpush2.msra.mxu0 %v638
    %720 = vmatprep.subr.mxu0 0.0
    %721 = vmatpush2.msra.mxu0 %v637
    %722 = vmatprep.subr.mxu0 0.0
    %723 = vmatpush2.msra.mxu0 %v636
    %724 = vmatprep.subr.mxu0 0.0
    %725 = vmatpush2.msra.mxu0 %v635
    %726 = vmatprep.subr.mxu0 0.0
    %727 = vmatpush2.msra.mxu0 %v634
    %728 = vmatprep.subr.mxu0 0.0
    %729 = vmatpush2.msra.mxu0 %v633
    %730 = vmatprep.subr.mxu0 0.0
    %731 = vmatpush2.msra.mxu0 %v632
    %732 = vmatprep.subr.mxu0 0.0
    %733 = vmatpush2.msra.mxu0 %v631
    %734 = vmatprep.subr.mxu0 0.0
    %735 = vmatpush2.msra.mxu0 %v630
    %736 = vmatprep.subr.mxu0 0.0
    %737 = vmatpush2.msra.mxu0 %v629
    %738 = vmatprep.subr.mxu0 0.0
    %739 = vmatpush2.msra.mxu0 %v628
    %740 = vmatprep.mubr.f32.mxu0 %v199
    %741 = vmatmul.mubr.f32.gmra.mxu0 %v197
    %v742 = vpop.f32.mrf.mxu0
    %v743 = vadd.f32 0.0, %v742
    %v744 = vpop.f32.mrf.mxu0
    %745 = vmatprep.mubr.f32.mxu0 %v203
    %746 = vmatmul.mubr.f32.gmra.mxu0 %v201
    %v747 = vpop.f32.mrf.mxu0
    %v748 = vadd.f32 0.0, %v747
    %v749 = vpop.f32.mrf.mxu0
    %750 = vmatprep.mubr.f32.mxu0 %v209
    %751 = vmatmul.mubr.f32.gmra.mxu0 %v207
    %v752 = vpop.f32.mrf.mxu0
    %v753 = vadd.f32 0.0, %v752
    %v754 = vpop.f32.mrf.mxu0
    %755 = vmatprep.mubr.f32.mxu0 %v213
    %756 = vmatmul.mubr.f32.gmra.mxu0 %v211
    %v757 = vpop.f32.mrf.mxu0
    %v758 = vadd.f32 0.0, %v757
    %v759 = vpop.f32.mrf.mxu0
    %760 = vmatprep.mubr.f32.mxu0 %v219
    %761 = vmatmul.mubr.f32.gmra.mxu0 %v217
    %v762 = vpop.f32.mrf.mxu0
    %v763 = vadd.f32 0.0, %v762
    %v764 = vpop.f32.mrf.mxu0
    %765 = vmatprep.mubr.f32.mxu0 %v223
    %766 = vmatmul.mubr.f32.gmra.mxu0 %v221
    %v767 = vpop.f32.mrf.mxu0
    %v768 = vadd.f32 0.0, %v767
    %v769 = vpop.f32.mrf.mxu0
    %770 = vmatprep.mubr.f32.mxu0 %v229
    %771 = vmatmul.mubr.f32.gmra.mxu0 %v227
    %v772 = vpop.f32.mrf.mxu0
    %v773 = vadd.f32 0.0, %v772
    %v774 = vpop.f32.mrf.mxu0
    %775 = vmatprep.mubr.f32.mxu0 %v233
    %776 = vmatmul.mubr.f32.gmra.mxu0 %v231
    %v777 = vpop.f32.mrf.mxu0
    %v778 = vadd.f32 0.0, %v777
    %v779 = vpop.f32.mrf.mxu0
    %780 = vmatprep.mubr.f32.mxu0 %v239
    %781 = vmatmul.mubr.f32.gmra.mxu0 %v237
    %v782 = vpop.f32.mrf.mxu0
    %v783 = vadd.f32 0.0, %v782
    %v784 = vpop.f32.mrf.mxu0
    %785 = vmatprep.mubr.f32.mxu0 %v243
    %786 = vmatmul.mubr.f32.gmra.mxu0 %v241
    %v787 = vpop.f32.mrf.mxu0
    %v788 = vadd.f32 0.0, %v787
    %v789 = vpop.f32.mrf.mxu0
    %790 = vmatprep.mubr.f32.mxu0 %v249
    %791 = vmatmul.mubr.f32.gmra.mxu0 %v247
    %v792 = vpop.f32.mrf.mxu0
    %v793 = vadd.f32 0.0, %v792
    %v794 = vpop.f32.mrf.mxu0
    %795 = vmatprep.mubr.f32.mxu0 %v253
    %796 = vmatmul.mubr.f32.gmra.mxu0 %v251
    %v797 = vpop.f32.mrf.mxu0
    %v798 = vadd.f32 0.0, %v797
    %v799 = vpop.f32.mrf.mxu0
    %800 = vmatprep.mubr.f32.mxu0 %v259
    %801 = vmatmul.mubr.f32.gmra.mxu0 %v257
    %v802 = vpop.f32.mrf.mxu0
    %v803 = vadd.f32 0.0, %v802
    %v804 = vpop.f32.mrf.mxu0
    %805 = vmatprep.mubr.f32.mxu0 %v263
    %806 = vmatmul.mubr.f32.gmra.mxu0 %v261
    %v807 = vpop.f32.mrf.mxu0
    %v808 = vadd.f32 0.0, %v807
    %v809 = vpop.f32.mrf.mxu0
    %810 = vmatprep.mubr.f32.mxu0 %v269
    %811 = vmatmul.mubr.f32.gmra.mxu0 %v267
    %v812 = vpop.f32.mrf.mxu0
    %v813 = vadd.f32 0.0, %v812
    %v814 = vpop.f32.mrf.mxu0
    %815 = vmatprep.mubr.f32.mxu0 %v273
    %816 = vmatmul.mubr.f32.gmra.mxu0 %v271
    %v817 = vpop.f32.mrf.mxu0
    %v818 = vadd.f32 0.0, %v817
    %v819 = vpop.f32.mrf.mxu0
    %820 = vdwg.mxu0
    %821 = vmatprep.subr.mxu0 0.0
    %822 = vmatpush1.msra.mxu0 %v659
    %823 = vmatprep.subr.mxu0 0.0
    %824 = vmatpush1.msra.mxu0 %v658
    %825 = vmatprep.subr.mxu0 0.0
    %826 = vmatpush1.msra.mxu0 %v657
    %827 = vmatprep.subr.mxu0 0.0
    %828 = vmatpush1.msra.mxu0 %v656
    %829 = vmatprep.subr.mxu0 0.0
    %830 = vmatpush1.msra.mxu0 %v655
    %831 = vmatprep.subr.mxu0 0.0
    %832 = vmatpush1.msra.mxu0 %v654
    %833 = vmatprep.subr.mxu0 0.0
    %834 = vmatpush1.msra.mxu0 %v653
    %835 = vmatprep.subr.mxu0 0.0
    %836 = vmatpush1.msra.mxu0 %v652
    %837 = vmatprep.subr.mxu0 0.0
    %838 = vmatpush1.msra.mxu0 %v651
    %839 = vmatprep.subr.mxu0 0.0
    %840 = vmatpush1.msra.mxu0 %v650
    %841 = vmatprep.subr.mxu0 0.0
    %842 = vmatpush1.msra.mxu0 %v649
    %843 = vmatprep.subr.mxu0 0.0
    %844 = vmatpush1.msra.mxu0 %v648
    %845 = vmatprep.subr.mxu0 0.0
    %846 = vmatpush1.msra.mxu0 %v647
    %847 = vmatprep.subr.mxu0 0.0
    %848 = vmatpush1.msra.mxu0 %v646
    %849 = vmatprep.subr.mxu0 0.0
    %850 = vmatpush1.msra.mxu0 %v645
    %851 = vmatprep.subr.mxu0 0.0
    %852 = vmatpush1.msra.mxu0 %v644
    %853 = vmatprep.subr.mxu0 0.0
    %854 = vmatpush2.msra.mxu0 %v675
    %855 = vmatprep.subr.mxu0 0.0
    %856 = vmatpush2.msra.mxu0 %v674
    %857 = vmatprep.subr.mxu0 0.0
    %858 = vmatpush2.msra.mxu0 %v673
    %859 = vmatprep.subr.mxu0 0.0
    %860 = vmatpush2.msra.mxu0 %v672
    %861 = vmatprep.subr.mxu0 0.0
    %862 = vmatpush2.msra.mxu0 %v671
    %863 = vmatprep.subr.mxu0 0.0
    %864 = vmatpush2.msra.mxu0 %v670
    %865 = vmatprep.subr.mxu0 0.0
    %866 = vmatpush2.msra.mxu0 %v669
    %867 = vmatprep.subr.mxu0 0.0
    %868 = vmatpush2.msra.mxu0 %v668
    %869 = vmatprep.subr.mxu0 0.0
    %870 = vmatpush2.msra.mxu0 %v667
    %871 = vmatprep.subr.mxu0 0.0
    %872 = vmatpush2.msra.mxu0 %v666
    %873 = vmatprep.subr.mxu0 0.0
    %874 = vmatpush2.msra.mxu0 %v665
    %875 = vmatprep.subr.mxu0 0.0
    %876 = vmatpush2.msra.mxu0 %v664
    %877 = vmatprep.subr.mxu0 0.0
    %878 = vmatpush2.msra.mxu0 %v663
    %879 = vmatprep.subr.mxu0 0.0
    %880 = vmatpush2.msra.mxu0 %v662
    %881 = vmatprep.subr.mxu0 0.0
    %882 = vmatpush2.msra.mxu0 %v661
    %883 = vmatprep.subr.mxu0 0.0
    %884 = vmatpush2.msra.mxu0 %v660
    %885 = vmatprep.mubr.f32.mxu0 %v312
    %886 = vmatmul.mubr.f32.gmra.mxu0 %v310
    %v887 = vpop.f32.mrf.mxu0
    %v888 = vadd.f32 %v743, %v887
    %v889 = vpop.f32.mrf.mxu0
    %890 = vmatprep.mubr.f32.mxu0 %v316
    %891 = vmatmul.mubr.f32.gmra.mxu0 %v314
    %v892 = vpop.f32.mrf.mxu0
    %v893 = vadd.f32 %v748, %v892
    %v894 = vpop.f32.mrf.mxu0
    %895 = vmatprep.mubr.f32.mxu0 %v322
    %896 = vmatmul.mubr.f32.gmra.mxu0 %v320
    %v897 = vpop.f32.mrf.mxu0
    %v898 = vadd.f32 %v753, %v897
    %v899 = vpop.f32.mrf.mxu0
    %900 = vmatprep.mubr.f32.mxu0 %v326
    %901 = vmatmul.mubr.f32.gmra.mxu0 %v324
    %v902 = vpop.f32.mrf.mxu0
    %v903 = vadd.f32 %v758, %v902
    %v904 = vpop.f32.mrf.mxu0
    %905 = vmatprep.mubr.f32.mxu0 %v332
    %906 = vmatmul.mubr.f32.gmra.mxu0 %v330
    %v907 = vpop.f32.mrf.mxu0
    %v908 = vadd.f32 %v763, %v907
    %v909 = vpop.f32.mrf.mxu0
    %910 = vmatprep.mubr.f32.mxu0 %v336
    %911 = vmatmul.mubr.f32.gmra.mxu0 %v334
    %v912 = vpop.f32.mrf.mxu0
    %v913 = vadd.f32 %v768, %v912
    %v914 = vpop.f32.mrf.mxu0
    %915 = vmatprep.mubr.f32.mxu0 %v342
    %916 = vmatmul.mubr.f32.gmra.mxu0 %v340
    %v917 = vpop.f32.mrf.mxu0
    %v918 = vadd.f32 %v773, %v917
    %v919 = vpop.f32.mrf.mxu0
    %920 = vmatprep.mubr.f32.mxu0 %v346
    %921 = vmatmul.mubr.f32.gmra.mxu0 %v344
    %v922 = vpop.f32.mrf.mxu0
    %v923 = vadd.f32 %v778, %v922
    %v924 = vpop.f32.mrf.mxu0
    %925 = vmatprep.mubr.f32.mxu0 %v352
    %926 = vmatmul.mubr.f32.gmra.mxu0 %v350
    %v927 = vpop.f32.mrf.mxu0
    %v928 = vadd.f32 %v783, %v927
    %v929 = vpop.f32.mrf.mxu0
    %930 = vmatprep.mubr.f32.mxu0 %v356
    %931 = vmatmul.mubr.f32.gmra.mxu0 %v354
    %v932 = vpop.f32.mrf.mxu0
    %v933 = vadd.f32 %v788, %v932
    %v934 = vpop.f32.mrf.mxu0
    %935 = vmatprep.mubr.f32.mxu0 %v362
    %936 = vmatmul.mubr.f32.gmra.mxu0 %v360
    %v937 = vpop.f32.mrf.mxu0
    %v938 = vadd.f32 %v793, %v937
    %v939 = vpop.f32.mrf.mxu0
    %940 = vmatprep.mubr.f32.mxu0 %v366
    %941 = vmatmul.mubr.f32.gmra.mxu0 %v364
    %v942 = vpop.f32.mrf.mxu0
    %v943 = vadd.f32 %v798, %v942
    %v944 = vpop.f32.mrf.mxu0
    %945 = vmatprep.mubr.f32.mxu0 %v372
    %946 = vmatmul.mubr.f32.gmra.mxu0 %v370
    %v947 = vpop.f32.mrf.mxu0
    %v948 = vadd.f32 %v803, %v947
    %v949 = vpop.f32.mrf.mxu0
    %950 = vmatprep.mubr.f32.mxu0 %v376
    %951 = vmatmul.mubr.f32.gmra.mxu0 %v374
    %v952 = vpop.f32.mrf.mxu0
    %v953 = vadd.f32 %v808, %v952
    %v954 = vpop.f32.mrf.mxu0
    %955 = vmatprep.mubr.f32.mxu0 %v382
    %956 = vmatmul.mubr.f32.gmra.mxu0 %v380
    %v957 = vpop.f32.mrf.mxu0
    %v958 = vadd.f32 %v813, %v957
    %v959 = vpop.f32.mrf.mxu0
    %960 = vmatprep.mubr.f32.mxu0 %v386
    %961 = vmatmul.mubr.f32.gmra.mxu0 %v384
    %v962 = vpop.f32.mrf.mxu0
    %v963 = vadd.f32 %v818, %v962
    %v964 = vpop.f32.mrf.mxu0
    %965 = vdwg.mxu0
    %966 = vst [vmem:[#allocation6] sm:$0xff] %v888
    %967 = vst [vmem:[#allocation6 + $0x8] sm:$0xff] %v893
    %968 = vst [vmem:[#allocation6 + $0x10] sm:$0xff] %v898
    %969 = vst [vmem:[#allocation6 + $0x18] sm:$0xff] %v903
    %970 = vst [vmem:[#allocation6 + $0x20] sm:$0xff] %v908
    %971 = vst [vmem:[#allocation6 + $0x28] sm:$0xff] %v913
    %972 = vst [vmem:[#allocation6 + $0x30] sm:$0xff] %v918
    %973 = vst [vmem:[#allocation6 + $0x38] sm:$0xff] %v923
    %974 = vst [vmem:[#allocation6 + $0x40] sm:$0xff] %v928
    %975 = vst [vmem:[#allocation6 + $0x48] sm:$0xff] %v933
    %976 = vst [vmem:[#allocation6 + $0x50] sm:$0xff] %v938
    %977 = vst [vmem:[#allocation6 + $0x58] sm:$0xff] %v943
    %978 = vst [vmem:[#allocation6 + $0x60] sm:$0xff] %v948
    %979 = vst [vmem:[#allocation6 + $0x68] sm:$0xff] %v953
    %980 = vst [vmem:[#allocation6 + $0x70] sm:$0xff] %v958
    %981 = vst [vmem:[#allocation6 + $0x78] sm:$0xff] %v963
    // Predicated region
    $region18: #{tpu_custom_call.1} parent=1 // pred_check
      _
    $region19: #{tpu_custom_call.1} parent=1 // pred_check_branch
      %983 = sbr.rel (0) target = $region21
    $region20: #{tpu_custom_call.1} parent=1 // pred_region
      %s985 = ssub.s32 4096, 4096
      %986 = vsyncadd [#allocation4], %s985
      %s987 = sshll.u32 [#allocation5], 4
      %s988 = int_to_ptr.vmem [resolvable:$true] %s987
      %993 = dma.vmem_to_hbm [thread:$0]  %s988, 4096, %s3, [#allocation4], 256, 256, 16
    $region21: #{tpu_custom_call.1} parent=1 // pred_fallthru
      _
    // Predicated region
    $region22: #{tpu_custom_call.1} parent=1 // pred_check
      _
    $region23: #{tpu_custom_call.1} parent=1 // pred_check_branch
      %995 = sbr.rel (0) target = $region25
    $region24: #{tpu_custom_call.1} parent=1 // pred_region
      %s997 = ssub.s32 2048, 2048
      %998 = vsyncadd [#allocation7], %s997
      %s999 = sshll.u32 [#allocation6], 4
      %s1000 = int_to_ptr.vmem [resolvable:$true] %s999
      %1005 = dma.vmem_to_hbm [thread:$0]  %s1000, 2048, %s4, [#allocation7], 128, 128, 8
    $region25: #{tpu_custom_call.1} parent=1 // pred_fallthru
      _
    // Predicated region
    $region26: #{tpu_custom_call.1} parent=1 // pred_check
      _
    $region27: #{tpu_custom_call.1} parent=1 // pred_check_branch
      %1007 = sbr.rel (0) target = $region29
    $region28: #{tpu_custom_call.1} parent=1 // pred_region
      %1008 = dma.done [#allocation4], 4096
    $region29: #{tpu_custom_call.1} parent=1 // pred_fallthru
      _
    // Predicated region
    $region30: #{tpu_custom_call.1} parent=1 // pred_check
      _
    $region31: #{tpu_custom_call.1} parent=1 // pred_check_branch
      %1010 = sbr.rel (0) target = $region33
    $region32: #{tpu_custom_call.1} parent=1 // pred_region
      %1011 = dma.done [#allocation7], 2048
    $region33: #{tpu_custom_call.1} parent=1 // pred_fallthru
      _
    %1012 = vsyncpa [#allocation3], 1
    %1013 = vsyncpa [#allocation4], 1
    %1014 = vsyncpa [#allocation7], 1

</llo_original>
